<compile_context>
chip_gen: v7x
topology: tpu7x:2x2x1
jax: 0.10.0
libtpu: 0.0.40
codegen_flags: <defaults>
</compile_context>

<pallas_src>
import math

import jax
import jax.numpy as jnp
from jax.experimental import pallas as pl
from jax.experimental.pallas import tpu as pltpu


def _mha_kernel(xt_ref, wq_ref, bq_ref, wk_ref, bk_ref, wv_ref, bv_ref,
                wo_ref, bo_ref, out_ref, attn_ref, q_s, k_s, v_s):
    """Grid = (batch, head); the head axis is the (inner) reduction axis.

    xt_ref   : (1, D, S)    x^T for this batch element        VMEM
    w{q,k,v} : (D, D)       torch (out, in) layout; W_Q pre-scaled by 1/sqrt(d_k)
    b{q,k,v} : (D, 1)       column biases (b_Q pre-scaled)
    wo_ref   : (1, d_k, D)  head h's row block of W_O^T
    bo_ref   : (1, D)
    out_ref  : (1, S, D)    output block, resident across the head axis (accumulator)
    attn_ref : (1, 1, S, S) attention written directly into (B, H, S, S)
    q_s/k_s/v_s : VMEM (H, d_k, S) f32 scratch, filled once per batch element (h == 0)
    """
    h = pl.program_id(1)

    # Full-width projections once per batch element, on the MXU:
    # (D, D) @ (D, S) -> (D, S); then a layout-preserving sublane split into
    # head-major (H, d_k, S) so per-head access below is a leading-dim index.
    @pl.when(h == 0)
    def _project():
        xt = xt_ref[0]                                                 # (D, S)
        q = jnp.dot(wq_ref[...], xt, preferred_element_type=jnp.float32) + bq_ref[...]
        k = jnp.dot(wk_ref[...], xt, preferred_element_type=jnp.float32) + bk_ref[...]
        v = jnp.dot(wv_ref[...], xt, preferred_element_type=jnp.float32) + bv_ref[...]
        q_s[...] = q.reshape(q_s.shape)
        k_s[...] = k.reshape(k_s.shape)
        v_s[...] = v.reshape(v_s.shape)

    qh = q_s[h]                                                        # (d_k, S)
    kh = k_s[h]
    vh = v_s[h]

    # scores[i, j] = sum_d q[d, i] * k[d, j]   (softmax scale already in W_Q)
    scores = jax.lax.dot_general(qh, kh, (((0,), (0,)), ((), ())),
                                 preferred_element_type=jnp.float32)   # (S, S)

    # Numerically stable, EXACT softmax (attn is returned to the caller).
    m = jnp.max(scores, axis=-1, keepdims=True)
    e = jnp.exp(scores - m)
    attn = e / jnp.sum(e, axis=-1, keepdims=True)                      # (S, S)
    attn_ref[...] = attn.reshape(attn_ref.shape).astype(attn_ref.dtype)

    # context[i, d] = sum_j attn[i, j] * v[d, j]
    ctx = jax.lax.dot_general(attn, vh, (((1,), (1,)), ((), ())),
                              preferred_element_type=jnp.float32)      # (S, d_k)

    # Head h's slice of the output projection, reduced over heads into the
    # output-resident block (no (H, S, D) intermediate, no VPU head-sum tensor).
    part = jnp.dot(ctx, wo_ref[0], preferred_element_type=jnp.float32)  # (S, D)

    @pl.when(h == 0)
    def _init_out():
        out_ref[...] = (part + bo_ref[...]).reshape(out_ref.shape).astype(out_ref.dtype)

    @pl.when(h > 0)
    def _accum_out():
        out_ref[...] += part.reshape(out_ref.shape).astype(out_ref.dtype)


def multi_head_attention(x, params, *, num_heads):
    """x: (B, S, D) float32.  params: torch Linear layout ((out, in) weights, (D,) biases).
    Returns (out, attn) matching the PyTorch module's forward (mask=None)."""
    B, S, D = x.shape
    assert D % num_heads == 0
    H = num_heads
    d_k = D // H
    scale = 1.0 / math.sqrt(d_k)

    # Host-side (XLA) prep, all tiny one-time ops: transpose x once, fold the
    # softmax scale into W_Q/b_Q, split W_O^T into head-major row blocks.
    xt = jnp.swapaxes(x, 1, 2)                        # (B, D, S)
    wq = params["W_Q"] * scale                        # (D, D), torch (out, in)
    bq = (params["b_Q"] * scale).reshape(D, 1)
    wk = params["W_K"]
    bk = params["b_K"].reshape(D, 1)
    wv = params["W_V"]
    bv = params["b_V"].reshape(D, 1)
    wo = params["W_O"].T.reshape(H, d_k, D)           # head-major row blocks of W_O^T
    bo = params["b_O"].reshape(1, D)

    def const2d(shape):
        return pl.BlockSpec(shape, lambda b, h: (0, 0))

    out, attn = pl.pallas_call(
        _mha_kernel,
        out_shape=(
            jax.ShapeDtypeStruct((B, S, D), x.dtype),
            jax.ShapeDtypeStruct((B, H, S, S), jnp.float32),
        ),
        grid_spec=pltpu.PrefetchScalarGridSpec(
            num_scalar_prefetch=0,
            grid=(B, H),                               # batch parallel, head = reduction
            in_specs=[
                pl.BlockSpec((1, D, S), lambda b, h: (b, 0, 0)),        # x^T
                const2d((D, D)), const2d((D, 1)),                       # W_Q, b_Q (pre-scaled)
                const2d((D, D)), const2d((D, 1)),                       # W_K, b_K
                const2d((D, D)), const2d((D, 1)),                       # W_V, b_V
                pl.BlockSpec((1, d_k, D), lambda b, h: (h, 0, 0)),      # W_O head block
                const2d((1, D)),                                        # b_O
            ],
            out_specs=(
                pl.BlockSpec((1, S, D), lambda b, h: (b, 0, 0)),        # out (accum over h)
                pl.BlockSpec((1, 1, S, S), lambda b, h: (b, h, 0, 0)),  # attn, final layout
            ),
            scratch_shapes=[
                pltpu.VMEM((H, d_k, S), jnp.float32),   # q^T, head-major
                pltpu.VMEM((H, d_k, S), jnp.float32),   # k^T
                pltpu.VMEM((H, d_k, S), jnp.float32),   # v^T
            ],
        ),
        compiler_params=pltpu.CompilerParams(
            dimension_semantics=("parallel", "arbitrary")),
    )(xt, wq, bq, wk, bk, wv, bv, wo, bo)
    return out, attn


def _reference_mha(x, params, *, num_heads):
    """Pure-JAX reference mirroring the PyTorch module, for validation."""
    B, S, D = x.shape
    d_k = D // num_heads

    def linear(v, w, b):
        return v @ w.T + b

    q = linear(x, params["W_Q"], params["b_Q"])
    k = linear(x, params["W_K"], params["b_K"])
    v = linear(x, params["W_V"], params["b_V"])

    def split(t):  # (B, S, D) -> (B, H, S, d_k)
        return t.reshape(B, S, num_heads, d_k).transpose(0, 2, 1, 3)

    qh, kh, vh = split(q), split(k), split(v)
    scores = jnp.einsum("bhqd,bhkd->bhqk", qh, kh) / math.sqrt(d_k)
    attn = jax.nn.softmax(scores, axis=-1)
    ctx = jnp.einsum("bhqk,bhkd->bhqd", attn, vh)
    ctx = ctx.transpose(0, 2, 1, 3).reshape(B, S, D)
    out = linear(ctx, params["W_O"], params["b_O"])
    return out, attn


if __name__ == "__main__":
    batch_size, seq_len, d_model, num_heads = 2, 10, 32, 4

    key = jax.random.PRNGKey(0)
    keys = jax.random.split(key, 9)

    # Deterministic parameter init (torch Linear layout: weight (out, in)).
    std = 1.0 / math.sqrt(d_model)
    params = {
        "W_Q": jax.random.uniform(keys[0], (d_model, d_model), jnp.float32, -std, std),
        "b_Q": jax.random.uniform(keys[1], (d_model,), jnp.float32, -std, std),
        "W_K": jax.random.uniform(keys[2], (d_model, d_model), jnp.float32, -std, std),
        "b_K": jax.random.uniform(keys[3], (d_model,), jnp.float32, -std, std),
        "W_V": jax.random.uniform(keys[4], (d_model, d_model), jnp.float32, -std, std),
        "b_V": jax.random.uniform(keys[5], (d_model,), jnp.float32, -std, std),
        "W_O": jax.random.uniform(keys[6], (d_model, d_model), jnp.float32, -std, std),
        "b_O": jax.random.uniform(keys[7], (d_model,), jnp.float32, -std, std),
    }

    x = jax.random.normal(keys[8], (batch_size, seq_len, d_model), jnp.float32)

    out, attn = multi_head_attention(x, params, num_heads=num_heads)
    out = jax.block_until_ready(out)
    attn = jax.block_until_ready(attn)

    ref_out, ref_attn = _reference_mha(x, params, num_heads=num_heads)
    assert out.shape == (batch_size, seq_len, d_model)
    assert attn.shape == (batch_size, num_heads, seq_len, seq_len)
    # Exact softmax in the kernel -> tight f32 tolerances, and rows sum to 1.
    assert jnp.allclose(attn, ref_attn, atol=1e-4, rtol=1e-4)
    assert jnp.allclose(out, ref_out, atol=1e-4, rtol=1e-4)
    assert jnp.allclose(attn.sum(-1), 1.0, atol=1e-5)

    print("KERNEL_OK")
</pallas_src>

<mosaic_0001>
module attributes {stable_mosaic.version = 11 : i64} {
  func.func @_mha_kernel(%arg0: i32, %arg1: i32, %arg2: memref<1x32x10xf32, #tpu.memory_space<vmem>>, %arg3: memref<32x32xf32, #tpu.memory_space<vmem>>, %arg4: memref<32x1xf32, #tpu.memory_space<vmem>>, %arg5: memref<32x32xf32, #tpu.memory_space<vmem>>, %arg6: memref<32x1xf32, #tpu.memory_space<vmem>>, %arg7: memref<32x32xf32, #tpu.memory_space<vmem>>, %arg8: memref<32x1xf32, #tpu.memory_space<vmem>>, %arg9: memref<1x8x32xf32, #tpu.memory_space<vmem>>, %arg10: memref<1x32xf32, #tpu.memory_space<vmem>>, %arg11: memref<1x10x32xf32, #tpu.memory_space<vmem>>, %arg12: memref<1x1x10x10xf32, #tpu.memory_space<vmem>>, %arg13: memref<4x8x10xf32, #tpu.memory_space<vmem>>, %arg14: memref<4x8x10xf32, #tpu.memory_space<vmem>>, %arg15: memref<4x8x10xf32, #tpu.memory_space<vmem>>) attributes {dimension_semantics = [#tpu.dimension_semantics<parallel>, #tpu.dimension_semantics<arbitrary>], iteration_bounds = array<i64: 2, 4>, scalar_prefetch = 0 : i64, scratch_operands = 3 : i64, tpu.core_type = #tpu.core_type<tc>, window_params = [{transform_indices = @transform_0, window_bounds = array<i64: 1, 32, 10>}, {pipeline_mode = #tpu.pipeline_mode<synchronous>, transform_indices = @transform_1, window_bounds = array<i64: 32, 32>}, {pipeline_mode = #tpu.pipeline_mode<synchronous>, transform_indices = @transform_2, window_bounds = array<i64: 32, 1>}, {pipeline_mode = #tpu.pipeline_mode<synchronous>, transform_indices = @transform_3, window_bounds = array<i64: 32, 32>}, {pipeline_mode = #tpu.pipeline_mode<synchronous>, transform_indices = @transform_4, window_bounds = array<i64: 32, 1>}, {pipeline_mode = #tpu.pipeline_mode<synchronous>, transform_indices = @transform_5, window_bounds = array<i64: 32, 32>}, {pipeline_mode = #tpu.pipeline_mode<synchronous>, transform_indices = @transform_6, window_bounds = array<i64: 32, 1>}, {transform_indices = @transform_7, window_bounds = array<i64: 1, 8, 32>}, {pipeline_mode = #tpu.pipeline_mode<synchronous>, transform_indices = @transform_8, window_bounds = array<i64: 1, 32>}, {transform_indices = @transform_9, window_bounds = array<i64: 1, 10, 32>}, {transform_indices = @transform_10, window_bounds = array<i64: 1, 1, 10, 10>}]} {
    %c0_i32 = arith.constant 0 : i32
    %0 = arith.cmpi eq, %arg1, %c0_i32 : i32
    %1 = arith.extui %0 : i1 to i32
    %c0_i32_0 = arith.constant 0 : i32
    %2 = arith.cmpi ne, %1, %c0_i32_0 : i32
    scf.if %2 {
      %c0_21 = arith.constant 0 : index
      %c0_22 = arith.constant 0 : index
      %c0_23 = arith.constant 0 : index
      %34 = vector.load %arg2[%c0_21, %c0_22, %c0_23] : memref<1x32x10xf32, #tpu.memory_space<vmem>>, vector<1x32x10xf32>
      %35 = vector.shape_cast %34 : vector<1x32x10xf32> to vector<32x10xf32>
      %c0_24 = arith.constant 0 : index
      %c0_25 = arith.constant 0 : index
      %36 = vector.load %arg3[%c0_24, %c0_25] : memref<32x32xf32, #tpu.memory_space<vmem>>, vector<32x32xf32>
      %cst_26 = arith.constant dense<0.000000e+00> : vector<32x10xf32>
      %37 = tpu.matmul %36, %35, %cst_26 {dimension_numbers = #tpu.dot_dimension_numbers<[1], [0], [0], [1], [0, 0, 1, 1], [], []>} : vector<32x32xf32>, vector<32x10xf32>, vector<32x10xf32> -> vector<32x10xf32>
      %c0_27 = arith.constant 0 : index
      %c0_28 = arith.constant 0 : index
      %38 = vector.load %arg4[%c0_27, %c0_28] : memref<32x1xf32, #tpu.memory_space<vmem>>, vector<32x1xf32>
      %39 = vector.broadcast %38 : vector<32x1xf32> to vector<32x10xf32>
      %40 = arith.addf %37, %39 : vector<32x10xf32>
      %c0_29 = arith.constant 0 : index
      %c0_30 = arith.constant 0 : index
      %41 = vector.load %arg5[%c0_29, %c0_30] : memref<32x32xf32, #tpu.memory_space<vmem>>, vector<32x32xf32>
      %cst_31 = arith.constant dense<0.000000e+00> : vector<32x10xf32>
      %42 = tpu.matmul %41, %35, %cst_31 {dimension_numbers = #tpu.dot_dimension_numbers<[1], [0], [0], [1], [0, 0, 1, 1], [], []>} : vector<32x32xf32>, vector<32x10xf32>, vector<32x10xf32> -> vector<32x10xf32>
      %c0_32 = arith.constant 0 : index
      %c0_33 = arith.constant 0 : index
      %43 = vector.load %arg6[%c0_32, %c0_33] : memref<32x1xf32, #tpu.memory_space<vmem>>, vector<32x1xf32>
      %44 = vector.broadcast %43 : vector<32x1xf32> to vector<32x10xf32>
      %45 = arith.addf %42, %44 : vector<32x10xf32>
      %c0_34 = arith.constant 0 : index
      %c0_35 = arith.constant 0 : index
      %46 = vector.load %arg7[%c0_34, %c0_35] : memref<32x32xf32, #tpu.memory_space<vmem>>, vector<32x32xf32>
      %cst_36 = arith.constant dense<0.000000e+00> : vector<32x10xf32>
      %47 = tpu.matmul %46, %35, %cst_36 {dimension_numbers = #tpu.dot_dimension_numbers<[1], [0], [0], [1], [0, 0, 1, 1], [], []>} : vector<32x32xf32>, vector<32x10xf32>, vector<32x10xf32> -> vector<32x10xf32>
      %c0_37 = arith.constant 0 : index
      %c0_38 = arith.constant 0 : index
      %48 = vector.load %arg8[%c0_37, %c0_38] : memref<32x1xf32, #tpu.memory_space<vmem>>, vector<32x1xf32>
      %49 = vector.broadcast %48 : vector<32x1xf32> to vector<32x10xf32>
      %50 = arith.addf %47, %49 : vector<32x10xf32>
      %51 = vector.shape_cast %40 : vector<32x10xf32> to vector<4x8x10xf32>
      %c0_39 = arith.constant 0 : index
      %c0_40 = arith.constant 0 : index
      %c0_41 = arith.constant 0 : index
      %52 = vector.load %arg13[%c0_39, %c0_40, %c0_41] : memref<4x8x10xf32, #tpu.memory_space<vmem>>, vector<4x8x10xf32>
      tpu.vector_store %arg13[%c0_39, %c0_40, %c0_41], %51 {strides = array<i32>} : memref<4x8x10xf32, #tpu.memory_space<vmem>>, vector<4x8x10xf32>,
      %53 = vector.shape_cast %45 : vector<32x10xf32> to vector<4x8x10xf32>
      %c0_42 = arith.constant 0 : index
      %c0_43 = arith.constant 0 : index
      %c0_44 = arith.constant 0 : index
      %54 = vector.load %arg14[%c0_42, %c0_43, %c0_44] : memref<4x8x10xf32, #tpu.memory_space<vmem>>, vector<4x8x10xf32>
      tpu.vector_store %arg14[%c0_42, %c0_43, %c0_44], %53 {strides = array<i32>} : memref<4x8x10xf32, #tpu.memory_space<vmem>>, vector<4x8x10xf32>,
      %55 = vector.shape_cast %50 : vector<32x10xf32> to vector<4x8x10xf32>
      %c0_45 = arith.constant 0 : index
      %c0_46 = arith.constant 0 : index
      %c0_47 = arith.constant 0 : index
      %56 = vector.load %arg15[%c0_45, %c0_46, %c0_47] : memref<4x8x10xf32, #tpu.memory_space<vmem>>, vector<4x8x10xf32>
      tpu.vector_store %arg15[%c0_45, %c0_46, %c0_47], %55 {strides = array<i32>} : memref<4x8x10xf32, #tpu.memory_space<vmem>>, vector<4x8x10xf32>,
    } else {
    }
    %3 = arith.index_cast %arg1 : i32 to index
    %c0 = arith.constant 0 : index
    %c0_1 = arith.constant 0 : index
    %4 = vector.load %arg13[%3, %c0, %c0_1] : memref<4x8x10xf32, #tpu.memory_space<vmem>>, vector<1x8x10xf32>
    %5 = vector.shape_cast %4 : vector<1x8x10xf32> to vector<8x10xf32>
    %6 = arith.index_cast %arg1 : i32 to index
    %c0_2 = arith.constant 0 : index
    %c0_3 = arith.constant 0 : index
    %7 = vector.load %arg14[%6, %c0_2, %c0_3] : memref<4x8x10xf32, #tpu.memory_space<vmem>>, vector<1x8x10xf32>
    %8 = vector.shape_cast %7 : vector<1x8x10xf32> to vector<8x10xf32>
    %9 = arith.index_cast %arg1 : i32 to index
    %c0_4 = arith.constant 0 : index
    %c0_5 = arith.constant 0 : index
    %10 = vector.load %arg15[%9, %c0_4, %c0_5] : memref<4x8x10xf32, #tpu.memory_space<vmem>>, vector<1x8x10xf32>
    %11 = vector.shape_cast %10 : vector<1x8x10xf32> to vector<8x10xf32>
    %cst = arith.constant dense<0.000000e+00> : vector<10x10xf32>
    %12 = tpu.matmul %5, %8, %cst {dimension_numbers = #tpu.dot_dimension_numbers<[0], [0], [1], [1], [0, 1, 1, 1], [], []>} : vector<8x10xf32>, vector<8x10xf32>, vector<10x10xf32> -> vector<10x10xf32>
    %cst_6 = arith.constant dense<0xFF800000> : vector<10xf32>
    %13 = vector.multi_reduction <maximumf>, %12, %cst_6 [1] : vector<10x10xf32> to vector<10xf32>
    %14 = vector.shape_cast %13 : vector<10xf32> to vector<10x1xf32>
    %15 = vector.broadcast %14 : vector<10x1xf32> to vector<10x10xf32>
    %16 = arith.subf %12, %15 : vector<10x10xf32>
    %17 = math.exp %16 : vector<10x10xf32>
    %cst_7 = arith.constant dense<0.000000e+00> : vector<10xf32>
    %18 = vector.multi_reduction <add>, %17, %cst_7 [1] : vector<10x10xf32> to vector<10xf32>
    %19 = vector.shape_cast %18 : vector<10xf32> to vector<10x1xf32>
    %20 = vector.broadcast %19 : vector<10x1xf32> to vector<10x10xf32>
    %21 = arith.divf %17, %20 : vector<10x10xf32>
    %22 = vector.shape_cast %21 : vector<10x10xf32> to vector<1x1x10x10xf32>
    %c0_8 = arith.constant 0 : index
    %c0_9 = arith.constant 0 : index
    %c0_10 = arith.constant 0 : index
    %c0_11 = arith.constant 0 : index
    %23 = vector.load %arg12[%c0_8, %c0_9, %c0_10, %c0_11] : memref<1x1x10x10xf32, #tpu.memory_space<vmem>>, vector<1x1x10x10xf32>
    tpu.vector_store %arg12[%c0_8, %c0_9, %c0_10, %c0_11], %22 {strides = array<i32>} : memref<1x1x10x10xf32, #tpu.memory_space<vmem>>, vector<1x1x10x10xf32>,
    %cst_12 = arith.constant dense<0.000000e+00> : vector<10x8xf32>
    %24 = tpu.matmul %21, %11, %cst_12 {dimension_numbers = #tpu.dot_dimension_numbers<[1], [1], [0], [0], [0, 0, 1, 0], [], []>} : vector<10x10xf32>, vector<8x10xf32>, vector<10x8xf32> -> vector<10x8xf32>
    %c0_13 = arith.constant 0 : index
    %c0_14 = arith.constant 0 : index
    %c0_15 = arith.constant 0 : index
    %25 = vector.load %arg9[%c0_13, %c0_14, %c0_15] : memref<1x8x32xf32, #tpu.memory_space<vmem>>, vector<1x8x32xf32>
    %26 = vector.shape_cast %25 : vector<1x8x32xf32> to vector<8x32xf32>
    %cst_16 = arith.constant dense<0.000000e+00> : vector<10x32xf32>
    %27 = tpu.matmul %24, %26, %cst_16 {dimension_numbers = #tpu.dot_dimension_numbers<[1], [0], [0], [1], [0, 0, 1, 1], [], []>} : vector<10x8xf32>, vector<8x32xf32>, vector<10x32xf32> -> vector<10x32xf32>
    %c0_i32_17 = arith.constant 0 : i32
    %28 = arith.cmpi eq, %arg1, %c0_i32_17 : i32
    %29 = arith.extui %28 : i1 to i32
    %c0_i32_18 = arith.constant 0 : i32
    %30 = arith.cmpi ne, %29, %c0_i32_18 : i32
    scf.if %30 {
      %c0_21 = arith.constant 0 : index
      %c0_22 = arith.constant 0 : index
      %34 = vector.load %arg10[%c0_21, %c0_22] : memref<1x32xf32, #tpu.memory_space<vmem>>, vector<1x32xf32>
      %35 = vector.broadcast %34 : vector<1x32xf32> to vector<10x32xf32>
      %36 = arith.addf %27, %35 : vector<10x32xf32>
      %37 = vector.shape_cast %36 : vector<10x32xf32> to vector<1x10x32xf32>
      %c0_23 = arith.constant 0 : index
      %c0_24 = arith.constant 0 : index
      %c0_25 = arith.constant 0 : index
      %38 = vector.load %arg11[%c0_23, %c0_24, %c0_25] : memref<1x10x32xf32, #tpu.memory_space<vmem>>, vector<1x10x32xf32>
      tpu.vector_store %arg11[%c0_23, %c0_24, %c0_25], %37 {strides = array<i32>} : memref<1x10x32xf32, #tpu.memory_space<vmem>>, vector<1x10x32xf32>,
    } else {
    }
    %c0_i32_19 = arith.constant 0 : i32
    %31 = arith.cmpi sgt, %arg1, %c0_i32_19 : i32
    %32 = arith.extui %31 : i1 to i32
    %c0_i32_20 = arith.constant 0 : i32
    %33 = arith.cmpi ne, %32, %c0_i32_20 : i32
    scf.if %33 {
      %c0_21 = arith.constant 0 : index
      %c0_22 = arith.constant 0 : index
      %c0_23 = arith.constant 0 : index
      %34 = vector.load %arg11[%c0_21, %c0_22, %c0_23] : memref<1x10x32xf32, #tpu.memory_space<vmem>>, vector<1x10x32xf32>
      %35 = vector.shape_cast %27 : vector<10x32xf32> to vector<1x10x32xf32>
      %36 = arith.addf %34, %35 : vector<1x10x32xf32>
      %c0_24 = arith.constant 0 : index
      %c0_25 = arith.constant 0 : index
      %c0_26 = arith.constant 0 : index
      %37 = vector.load %arg11[%c0_24, %c0_25, %c0_26] : memref<1x10x32xf32, #tpu.memory_space<vmem>>, vector<1x10x32xf32>
      tpu.vector_store %arg11[%c0_24, %c0_25, %c0_26], %36 {strides = array<i32>} : memref<1x10x32xf32, #tpu.memory_space<vmem>>, vector<1x10x32xf32>,
    } else {
    }
    return
  }
  func.func @transform_0(%arg0: i32, %arg1: i32) -> (i32, i32, i32) {
    %c0_i32 = arith.constant 0 : i32
    %c0_i32_0 = arith.constant 0 : i32
    %c0_i32_1 = arith.constant 0 : i32
    return %arg0, %c0_i32, %c0_i32_0 : i32, i32, i32
  }
  func.func @transform_1(%arg0: i32, %arg1: i32) -> (i32, i32) {
    %c0_i32 = arith.constant 0 : i32
    %c0_i32_0 = arith.constant 0 : i32
    %c0_i32_1 = arith.constant 0 : i32
    return %c0_i32, %c0_i32_0 : i32, i32
  }
  func.func @transform_2(%arg0: i32, %arg1: i32) -> (i32, i32) {
    %c0_i32 = arith.constant 0 : i32
    %c0_i32_0 = arith.constant 0 : i32
    %c0_i32_1 = arith.constant 0 : i32
    return %c0_i32, %c0_i32_0 : i32, i32
  }
  func.func @transform_3(%arg0: i32, %arg1: i32) -> (i32, i32) {
    %c0_i32 = arith.constant 0 : i32
    %c0_i32_0 = arith.constant 0 : i32
    %c0_i32_1 = arith.constant 0 : i32
    return %c0_i32, %c0_i32_0 : i32, i32
  }
  func.func @transform_4(%arg0: i32, %arg1: i32) -> (i32, i32) {
    %c0_i32 = arith.constant 0 : i32
    %c0_i32_0 = arith.constant 0 : i32
    %c0_i32_1 = arith.constant 0 : i32
    return %c0_i32, %c0_i32_0 : i32, i32
  }
  func.func @transform_5(%arg0: i32, %arg1: i32) -> (i32, i32) {
    %c0_i32 = arith.constant 0 : i32
    %c0_i32_0 = arith.constant 0 : i32
    %c0_i32_1 = arith.constant 0 : i32
    return %c0_i32, %c0_i32_0 : i32, i32
  }
  func.func @transform_6(%arg0: i32, %arg1: i32) -> (i32, i32) {
    %c0_i32 = arith.constant 0 : i32
    %c0_i32_0 = arith.constant 0 : i32
    %c0_i32_1 = arith.constant 0 : i32
    return %c0_i32, %c0_i32_0 : i32, i32
  }
  func.func @transform_7(%arg0: i32, %arg1: i32) -> (i32, i32, i32) {
    %c0_i32 = arith.constant 0 : i32
    %c0_i32_0 = arith.constant 0 : i32
    %c0_i32_1 = arith.constant 0 : i32
    return %arg1, %c0_i32, %c0_i32_0 : i32, i32, i32
  }
  func.func @transform_8(%arg0: i32, %arg1: i32) -> (i32, i32) {
    %c0_i32 = arith.constant 0 : i32
    %c0_i32_0 = arith.constant 0 : i32
    %c0_i32_1 = arith.constant 0 : i32
    return %c0_i32, %c0_i32_0 : i32, i32
  }
  func.func @transform_9(%arg0: i32, %arg1: i32) -> (i32, i32, i32) {
    %c0_i32 = arith.constant 0 : i32
    %c0_i32_0 = arith.constant 0 : i32
    %c0_i32_1 = arith.constant 0 : i32
    return %arg0, %c0_i32, %c0_i32_0 : i32, i32, i32
  }
  func.func @transform_10(%arg0: i32, %arg1: i32) -> (i32, i32, i32, i32) {
    %c0_i32 = arith.constant 0 : i32
    %c0_i32_0 = arith.constant 0 : i32
    %c0_i32_1 = arith.constant 0 : i32
    return %arg0, %arg1, %c0_i32, %c0_i32_0 : i32, i32, i32, i32
  }
}

</mosaic_0001>

<llo_original>
// kernel: tpu_custom_call.1
$region0: #{tpu_custom_call.1}
  #allocation0 [shape = 'u32[]', space=smem, size = 0x4, offset = 0x4, fixed_abs, tag = 'smem constant byte address 0x4 - core index']
  #allocation1 [shape = 'u32[144,128]{1,0:T(1,128)}', space=vmem, size = 0x12000, scoped, tag = 'internal scratch']
  #allocation2 [shape = 'f32[4,8,10]{2,1,0:T(8,128)}', space=vmem, size = 0x4000, scoped, tag = 'scratch operand']
  #allocation3 [shape = 'f32[4,8,10]{2,1,0:T(8,128)}', space=vmem, size = 0x4000, scoped, tag = 'scratch operand']
  #allocation4 [shape = 'f32[4,8,10]{2,1,0:T(8,128)}', space=vmem, size = 0x4000, scoped, tag = 'scratch operand']
  %s0 = inlined_call_operand.vmem [shape: f32[2,32,10], index: 0, kind: input, shape index: {}]
  %s1 = inlined_call_operand.vmem [shape: f32[32,32], index: 1, kind: input, shape index: {}]
  %s2 = inlined_call_operand.vmem [shape: f32[32,1], index: 2, kind: input, shape index: {}]
  %s3 = inlined_call_operand.vmem [shape: f32[32,32], index: 3, kind: input, shape index: {}]
  %s4 = inlined_call_operand.vmem [shape: f32[32,1], index: 4, kind: input, shape index: {}]
  %s5 = inlined_call_operand.vmem [shape: f32[32,32], index: 5, kind: input, shape index: {}]
  %s6 = inlined_call_operand.vmem [shape: f32[32,1], index: 6, kind: input, shape index: {}]
  %s7 = inlined_call_operand.vmem [shape: f32[4,8,32], index: 7, kind: input, shape index: {}]
  %s8 = inlined_call_operand.vmem [shape: f32[1,32], index: 8, kind: input, shape index: {}]
  %s9 = inlined_call_operand.vmem [shape: f32[2,10,32], index: 9, kind: output, shape index: {0}]
  %s10 = inlined_call_operand.vmem [shape: f32[2,4,10,10], index: 10, kind: output, shape index: {1}]
  %11 = xla_tuple %s9, %s10
  %s12 = sld [smem:[#allocation0]]
  $region89: #{tpu_custom_call.1} parent=0
    _
  %s14 = ssub.s32 1, %s12
  %s15 = scalar_select 0, %s14, %s12
  loop: start=0, step=1, limit=10
  $region2: #{tpu_custom_call.1} parent=0 // loop_pre_header
    _
  $region3: #{tpu_custom_call.1} parent=0 // loop_header
    %s17 = sphi 0, %s21
    %p18 = scmp.ge.s32.totalorder %s17, 10
    %s24 = sphi 0, %s36
    %s25 = sphi 0, %s32
    %s26 = sphi 0, %s24
    %s27 = sphi 0, %s25
    %s28 = sphi 0, %s26
    %s29 = sphi 0, %s27
    %s39 = sphi 0, %s41
    %s42 = sphi 0, %s39
    %s43 = sphi 0, %s42
    %s59 = sphi 0, %s43
    %s63 = sphi 0, %s63
    %s65 = sphi 0, %s63
    %s66 = sphi 0, %s65
    %s80 = sphi 0, %s66
    %s84 = sphi 0, %s84
    %s86 = sphi 0, %s84
    %s87 = sphi 0, %s86
    %s101 = sphi 0, %s87
    %s105 = sphi 0, %s105
    %s107 = sphi 0, %s105
    %s108 = sphi 0, %s107
    %s122 = sphi 0, %s108
    %s126 = sphi 0, %s126
    %s128 = sphi 0, %s126
    %s129 = sphi 0, %s128
    %s143 = sphi 0, %s129
    %s147 = sphi 0, %s147
    %s149 = sphi 0, %s147
    %s150 = sphi 0, %s149
    %s164 = sphi 0, %s150
    %s168 = sphi 0, %s168
    %s170 = sphi 0, %s168
    %s171 = sphi 0, %s170
    %s185 = sphi 0, %s171
    %s191 = sphi 0, %s193
    %s194 = sphi 0, %s191
    %s195 = sphi 0, %s194
    %s211 = sphi 0, %s195
    %s215 = sphi 0, %s215
    %s217 = sphi 0, %s215
    %s218 = sphi 0, %s217
    %s232 = sphi 0, %s218
    %s238 = sphi 0, %s240
    %s241 = sphi 0, %s238
    %s242 = sphi 0, %s241
    %s258 = sphi 0, %s242
    %s266 = sphi 0, %s268
    %s269 = sphi 0, %s266
    %s270 = sphi 0, %s269
    %s286 = sphi 0, %s270
  $region4: #{tpu_custom_call.1} parent=0 // loop_header_branch
    %20 = sbr.rel (%p18) target = $region8
  $region5: #{tpu_custom_call.1} parent=0 // loop_body
    %s22 = ssub.s32 %s17, 1
    %s23 = ssub.s32 %s17, 2
    %s30 = sadd.s32 1, %s25
    %p31 = scmp.ge.s32.totalorder %s30, 4
    %s32 = scalar_select %p31, 0, %s30
    %s33 = sadd.s32 1, %s24
    %s34 = scalar_select %p31, %s33, %s24
    %p35 = scmp.ge.s32.totalorder %s34, 2
    %s36 = scalar_select %p35, 0, %s34
    %s37 = ssub.s32 %s24, %s36
    %p38 = scmp.eq.s32.totalorder %s37, 0
    %s40 = sadd.s32 %s39, 1
    %s41 = scalar_select %p38, %s39, %s40
    %p44 = pneg %p38
    %p45 = scmp.eq.s32.totalorder %s17, 7
    %p46 = por %p44, %p45
    %p47 = scmp.ne.s32.totalorder %s39, %s42
    %p48 = scmp.eq.s32.totalorder %s17, 0
    %p49 = por %p47, %p48
    %p50 = scmp.ne.s32.totalorder %s39, %s42
    %p51 = scmp.eq.s32.totalorder %s22, 7
    %p52 = por %p50, %p51
    %p53 = scmp.ne.s32.totalorder %s42, %s43
    %p54 = scmp.eq.s32.totalorder %s22, 0
    %p55 = por %p53, %p54
    %p56 = scmp.ne.s32.totalorder %s42, %s43
    %p57 = scmp.eq.s32.totalorder %s23, 7
    %p58 = por %p56, %p57
    %p60 = scmp.ne.s32.totalorder %s43, %s59
    %p61 = scmp.eq.s32.totalorder %s23, 0
    %p62 = por %p60, %p61
    %s64 = sadd.s32 %s63, 1
    %p67 = scmp.eq.s32.totalorder %s17, 7
    %p68 = scmp.ne.s32.totalorder %s63, %s65
    %p69 = scmp.eq.s32.totalorder %s17, 0
    %p70 = por %p68, %p69
    %p71 = scmp.ne.s32.totalorder %s63, %s65
    %p72 = scmp.eq.s32.totalorder %s22, 7
    %p73 = por %p71, %p72
    %p74 = scmp.ne.s32.totalorder %s65, %s66
    %p75 = scmp.eq.s32.totalorder %s22, 0
    %p76 = por %p74, %p75
    %p77 = scmp.ne.s32.totalorder %s65, %s66
    %p78 = scmp.eq.s32.totalorder %s23, 7
    %p79 = por %p77, %p78
    %p81 = scmp.ne.s32.totalorder %s66, %s80
    %p82 = scmp.eq.s32.totalorder %s23, 0
    %p83 = por %p81, %p82
    %s85 = sadd.s32 %s84, 1
    %p88 = scmp.eq.s32.totalorder %s17, 7
    %p89 = scmp.ne.s32.totalorder %s84, %s86
    %p90 = scmp.eq.s32.totalorder %s17, 0
    %p91 = por %p89, %p90
    %p92 = scmp.ne.s32.totalorder %s84, %s86
    %p93 = scmp.eq.s32.totalorder %s22, 7
    %p94 = por %p92, %p93
    %p95 = scmp.ne.s32.totalorder %s86, %s87
    %p96 = scmp.eq.s32.totalorder %s22, 0
    %p97 = por %p95, %p96
    %p98 = scmp.ne.s32.totalorder %s86, %s87
    %p99 = scmp.eq.s32.totalorder %s23, 7
    %p100 = por %p98, %p99
    %p102 = scmp.ne.s32.totalorder %s87, %s101
    %p103 = scmp.eq.s32.totalorder %s23, 0
    %p104 = por %p102, %p103
    %s106 = sadd.s32 %s105, 1
    %p109 = scmp.eq.s32.totalorder %s17, 7
    %p110 = scmp.ne.s32.totalorder %s105, %s107
    %p111 = scmp.eq.s32.totalorder %s17, 0
    %p112 = por %p110, %p111
    %p113 = scmp.ne.s32.totalorder %s105, %s107
    %p114 = scmp.eq.s32.totalorder %s22, 7
    %p115 = por %p113, %p114
    %p116 = scmp.ne.s32.totalorder %s107, %s108
    %p117 = scmp.eq.s32.totalorder %s22, 0
    %p118 = por %p116, %p117
    %p119 = scmp.ne.s32.totalorder %s107, %s108
    %p120 = scmp.eq.s32.totalorder %s23, 7
    %p121 = por %p119, %p120
    %p123 = scmp.ne.s32.totalorder %s108, %s122
    %p124 = scmp.eq.s32.totalorder %s23, 0
    %p125 = por %p123, %p124
    %s127 = sadd.s32 %s126, 1
    %p130 = scmp.eq.s32.totalorder %s17, 7
    %p131 = scmp.ne.s32.totalorder %s126, %s128
    %p132 = scmp.eq.s32.totalorder %s17, 0
    %p133 = por %p131, %p132
    %p134 = scmp.ne.s32.totalorder %s126, %s128
    %p135 = scmp.eq.s32.totalorder %s22, 7
    %p136 = por %p134, %p135
    %p137 = scmp.ne.s32.totalorder %s128, %s129
    %p138 = scmp.eq.s32.totalorder %s22, 0
    %p139 = por %p137, %p138
    %p140 = scmp.ne.s32.totalorder %s128, %s129
    %p141 = scmp.eq.s32.totalorder %s23, 7
    %p142 = por %p140, %p141
    %p144 = scmp.ne.s32.totalorder %s129, %s143
    %p145 = scmp.eq.s32.totalorder %s23, 0
    %p146 = por %p144, %p145
    %s148 = sadd.s32 %s147, 1
    %p151 = scmp.eq.s32.totalorder %s17, 7
    %p152 = scmp.ne.s32.totalorder %s147, %s149
    %p153 = scmp.eq.s32.totalorder %s17, 0
    %p154 = por %p152, %p153
    %p155 = scmp.ne.s32.totalorder %s147, %s149
    %p156 = scmp.eq.s32.totalorder %s22, 7
    %p157 = por %p155, %p156
    %p158 = scmp.ne.s32.totalorder %s149, %s150
    %p159 = scmp.eq.s32.totalorder %s22, 0
    %p160 = por %p158, %p159
    %p161 = scmp.ne.s32.totalorder %s149, %s150
    %p162 = scmp.eq.s32.totalorder %s23, 7
    %p163 = por %p161, %p162
    %p165 = scmp.ne.s32.totalorder %s150, %s164
    %p166 = scmp.eq.s32.totalorder %s23, 0
    %p167 = por %p165, %p166
    %s169 = sadd.s32 %s168, 1
    %p172 = scmp.eq.s32.totalorder %s17, 7
    %p173 = scmp.ne.s32.totalorder %s168, %s170
    %p174 = scmp.eq.s32.totalorder %s17, 0
    %p175 = por %p173, %p174
    %p176 = scmp.ne.s32.totalorder %s168, %s170
    %p177 = scmp.eq.s32.totalorder %s22, 7
    %p178 = por %p176, %p177
    %p179 = scmp.ne.s32.totalorder %s170, %s171
    %p180 = scmp.eq.s32.totalorder %s22, 0
    %p181 = por %p179, %p180
    %p182 = scmp.ne.s32.totalorder %s170, %s171
    %p183 = scmp.eq.s32.totalorder %s23, 7
    %p184 = por %p182, %p183
    %p186 = scmp.ne.s32.totalorder %s171, %s185
    %p187 = scmp.eq.s32.totalorder %s23, 0
    %p188 = por %p186, %p187
    %s189 = ssub.s32 %s25, %s32
    %p190 = scmp.eq.s32.totalorder %s189, 0
    %s192 = sadd.s32 %s191, 1
    %s193 = scalar_select %p190, %s191, %s192
    %p196 = pneg %p190
    %p197 = scmp.eq.s32.totalorder %s17, 7
    %p198 = por %p196, %p197
    %p199 = scmp.ne.s32.totalorder %s191, %s194
    %p200 = scmp.eq.s32.totalorder %s17, 0
    %p201 = por %p199, %p200
    %p202 = scmp.ne.s32.totalorder %s191, %s194
    %p203 = scmp.eq.s32.totalorder %s22, 7
    %p204 = por %p202, %p203
    %p205 = scmp.ne.s32.totalorder %s194, %s195
    %p206 = scmp.eq.s32.totalorder %s22, 0
    %p207 = por %p205, %p206
    %p208 = scmp.ne.s32.totalorder %s194, %s195
    %p209 = scmp.eq.s32.totalorder %s23, 7
    %p210 = por %p208, %p209
    %p212 = scmp.ne.s32.totalorder %s195, %s211
    %p213 = scmp.eq.s32.totalorder %s23, 0
    %p214 = por %p212, %p213
    %s216 = sadd.s32 %s215, 1
    %p219 = scmp.eq.s32.totalorder %s17, 7
    %p220 = scmp.ne.s32.totalorder %s215, %s217
    %p221 = scmp.eq.s32.totalorder %s17, 0
    %p222 = por %p220, %p221
    %p223 = scmp.ne.s32.totalorder %s215, %s217
    %p224 = scmp.eq.s32.totalorder %s22, 7
    %p225 = por %p223, %p224
    %p226 = scmp.ne.s32.totalorder %s217, %s218
    %p227 = scmp.eq.s32.totalorder %s22, 0
    %p228 = por %p226, %p227
    %p229 = scmp.ne.s32.totalorder %s217, %s218
    %p230 = scmp.eq.s32.totalorder %s23, 7
    %p231 = por %p229, %p230
    %p233 = scmp.ne.s32.totalorder %s218, %s232
    %p234 = scmp.eq.s32.totalorder %s23, 0
    %p235 = por %p233, %p234
    %s236 = ssub.s32 %s24, %s36
    %p237 = scmp.eq.s32.totalorder %s236, 0
    %s239 = sadd.s32 %s238, 1
    %s240 = scalar_select %p237, %s238, %s239
    %p243 = pneg %p237
    %p244 = scmp.eq.s32.totalorder %s17, 7
    %p245 = por %p243, %p244
    %p246 = scmp.ne.s32.totalorder %s238, %s241
    %p247 = scmp.eq.s32.totalorder %s17, 0
    %p248 = por %p246, %p247
    %p249 = scmp.ne.s32.totalorder %s238, %s241
    %p250 = scmp.eq.s32.totalorder %s22, 7
    %p251 = por %p249, %p250
    %p252 = scmp.ne.s32.totalorder %s241, %s242
    %p253 = scmp.eq.s32.totalorder %s22, 0
    %p254 = por %p252, %p253
    %p255 = scmp.ne.s32.totalorder %s241, %s242
    %p256 = scmp.eq.s32.totalorder %s23, 7
    %p257 = por %p255, %p256
    %p259 = scmp.ne.s32.totalorder %s242, %s258
    %p260 = scmp.eq.s32.totalorder %s23, 0
    %p261 = por %p259, %p260
    %s262 = ssub.s32 %s24, %s36
    %s263 = ssub.s32 %s25, %s32
    %s264 = sor.u32 %s262, %s263
    %p265 = scmp.eq.s32.totalorder %s264, 0
    %s267 = sadd.s32 %s266, 1
    %s268 = scalar_select %p265, %s266, %s267
    %p271 = pneg %p265
    %p272 = scmp.eq.s32.totalorder %s17, 7
    %p273 = por %p271, %p272
    %p274 = scmp.ne.s32.totalorder %s266, %s269
    %p275 = scmp.eq.s32.totalorder %s17, 0
    %p276 = por %p274, %p275
    %p277 = scmp.ne.s32.totalorder %s266, %s269
    %p278 = scmp.eq.s32.totalorder %s22, 7
    %p279 = por %p277, %p278
    %p280 = scmp.ne.s32.totalorder %s269, %s270
    %p281 = scmp.eq.s32.totalorder %s22, 0
    %p282 = por %p280, %p281
    %p283 = scmp.ne.s32.totalorder %s269, %s270
    %p284 = scmp.eq.s32.totalorder %s23, 7
    %p285 = por %p283, %p284
    %p287 = scmp.ne.s32.totalorder %s270, %s286
    %p288 = scmp.eq.s32.totalorder %s23, 0
    %p289 = por %p287, %p288
    %p290 = scmp.le.s32.totalorder 1, %s17
    %p291 = scmp.lt.s32.totalorder %s17, 9
    %p292 = pnand %p290, %p291
    %p293 = pneg %p292
    // Predicated region
    $region9: #{tpu_custom_call.1} parent=5 // pred_check
      _
    $region10: #{tpu_custom_call.1} parent=5 // pred_check_branch
      %295 = sbr.rel (%p292) target = $region12
    $region11: #{tpu_custom_call.1} parent=5 // pred_region
      %s296 = ssub.s32 %s17, 1
      // Predicated region
      $region13: #{tpu_custom_call.1} parent=11 // pred_check
        %p297 = pneg %p76
      $region14: #{tpu_custom_call.1} parent=11 // pred_check_branch
        %299 = sbr.rel (%p297) target = $region16
      $region15: #{tpu_custom_call.1} parent=11 // pred_region
        _
      $region16: #{tpu_custom_call.1} parent=11 // pred_fallthru
        _
      // Predicated region
      $region17: #{tpu_custom_call.1} parent=11 // pred_check
        %p300 = pneg %p97
      $region18: #{tpu_custom_call.1} parent=11 // pred_check_branch
        %302 = sbr.rel (%p300) target = $region20
      $region19: #{tpu_custom_call.1} parent=11 // pred_region
        _
      $region20: #{tpu_custom_call.1} parent=11 // pred_fallthru
        _
      // Predicated region
      $region21: #{tpu_custom_call.1} parent=11 // pred_check
        %p303 = pneg %p118
      $region22: #{tpu_custom_call.1} parent=11 // pred_check_branch
        %305 = sbr.rel (%p303) target = $region24
      $region23: #{tpu_custom_call.1} parent=11 // pred_region
        _
      $region24: #{tpu_custom_call.1} parent=11 // pred_fallthru
        _
      // Predicated region
      $region25: #{tpu_custom_call.1} parent=11 // pred_check
        %p306 = pneg %p139
      $region26: #{tpu_custom_call.1} parent=11 // pred_check_branch
        %308 = sbr.rel (%p306) target = $region28
      $region27: #{tpu_custom_call.1} parent=11 // pred_region
        _
      $region28: #{tpu_custom_call.1} parent=11 // pred_fallthru
        _
      // Predicated region
      $region29: #{tpu_custom_call.1} parent=11 // pred_check
        %p309 = pneg %p160
      $region30: #{tpu_custom_call.1} parent=11 // pred_check_branch
        %311 = sbr.rel (%p309) target = $region32
      $region31: #{tpu_custom_call.1} parent=11 // pred_region
        _
      $region32: #{tpu_custom_call.1} parent=11 // pred_fallthru
        _
      // Predicated region
      $region33: #{tpu_custom_call.1} parent=11 // pred_check
        %p312 = pneg %p181
      $region34: #{tpu_custom_call.1} parent=11 // pred_check_branch
        %314 = sbr.rel (%p312) target = $region36
      $region35: #{tpu_custom_call.1} parent=11 // pred_region
        _
      $region36: #{tpu_custom_call.1} parent=11 // pred_fallthru
        _
      // Predicated region
      $region37: #{tpu_custom_call.1} parent=11 // pred_check
        %p315 = pneg %p228
      $region38: #{tpu_custom_call.1} parent=11 // pred_check_branch
        %317 = sbr.rel (%p315) target = $region40
      $region39: #{tpu_custom_call.1} parent=11 // pred_region
        _
      $region40: #{tpu_custom_call.1} parent=11 // pred_fallthru
        _
    $region12: #{tpu_custom_call.1} parent=5 // pred_fallthru
      _
    %p318 = scmp.lt.s32.totalorder %s17, 8
    // Predicated region
    $region41: #{tpu_custom_call.1} parent=5 // pred_check
      %p319 = pneg %p318
    $region42: #{tpu_custom_call.1} parent=5 // pred_check_branch
      %321 = sbr.rel (%p319) target = $region44
    $region43: #{tpu_custom_call.1} parent=5 // pred_region
      // Predicated region
      $region45: #{tpu_custom_call.1} parent=43 // pred_check
        %p322 = pneg %p49
      $region46: #{tpu_custom_call.1} parent=43 // pred_check_branch
        %324 = sbr.rel (%p322) target = $region48
      $region47: #{tpu_custom_call.1} parent=43 // pred_region
        %p325 = scmp.lt.s32.totalorder %s24, 1
        %s326 = scalar_select %p325, %s24, 1
        %s327 = smul.addr %s326, 4
        %s328 = smul.addr %s327, 8
        %s329 = scalar_lea.vmem %s0, %s328
      $region48: #{tpu_custom_call.1} parent=43 // pred_fallthru
        _
      // Predicated region
      $region49: #{tpu_custom_call.1} parent=43 // pred_check
        %p330 = pneg %p201
      $region50: #{tpu_custom_call.1} parent=43 // pred_check_branch
        %332 = sbr.rel (%p330) target = $region52
      $region51: #{tpu_custom_call.1} parent=43 // pred_region
        %p333 = scmp.lt.s32.totalorder %s25, 3
        %s334 = scalar_select %p333, %s25, 3
        %s335 = smul.addr %s334, 8
        %s336 = scalar_lea.vmem %s7, %s335
      $region52: #{tpu_custom_call.1} parent=43 // pred_fallthru
        _
    $region44: #{tpu_custom_call.1} parent=5 // pred_fallthru
      _
    %p337 = scmp.le.s32.totalorder 1, %s17
    %p338 = scmp.lt.s32.totalorder %s17, 9
    %p339 = pnand %p337, %p338
    %p340 = pneg %p339
    // Predicated region
    $region53: #{tpu_custom_call.1} parent=5 // pred_check
      _
    $region54: #{tpu_custom_call.1} parent=5 // pred_check_branch
      %342 = sbr.rel (%p339) target = $region56
    $region55: #{tpu_custom_call.1} parent=5 // pred_region
      %s343 = ssub.s32 %s17, 1
      %p344 = scmp.lt.s32.totalorder %s26, 1
      %s345 = scalar_select %p344, %s26, 1
      %s346 = smul.addr %s345, 4
      %s347 = smul.addr %s346, 8
      %s348 = scalar_lea.vmem %s0, %s347
      %p349 = pneg %p55
      %p350 = pneg %p52
      %p351 = pneg %p76
      %p352 = pneg %p73
      %p353 = pneg %p97
      %p354 = pneg %p94
      %p355 = pneg %p118
      %p356 = pneg %p115
      %p357 = pneg %p139
      %p358 = pneg %p136
      %p359 = pneg %p160
      %p360 = pneg %p157
      %p361 = pneg %p181
      %p362 = pneg %p178
      %p363 = scmp.lt.s32.totalorder %s27, 3
      %s364 = scalar_select %p363, %s27, 3
      %s365 = smul.addr %s364, 8
      %s366 = scalar_lea.vmem %s7, %s365
      %p367 = pneg %p207
      %p368 = pneg %p204
      %p369 = pneg %p228
      %p370 = pneg %p225
      %p371 = pneg %p254
      %p372 = pneg %p251
      %p373 = scmp.lt.s32.totalorder %s26, 1
      %s374 = scalar_select %p373, %s26, 1
      %s375 = smul.addr %s374, 2
      %s376 = smul.addr %s375, 8
      %s377 = scalar_lea.vmem %s9, %s376
      %p378 = pneg %p282
      %p379 = pneg %p279
      %p380 = scmp.lt.s32.totalorder %s26, 1
      %s381 = scalar_select %p380, %s26, 1
      %p382 = scmp.lt.s32.totalorder %s27, 3
      %s383 = scalar_select %p382, %s27, 3
      %s384 = smul.addr %s383, 2
      %s385 = smul.addr %s381, 8
      %s386 = sadd.s32 %s384, %s385
      %s387 = smul.addr %s386, 8
      %s388 = scalar_lea.vmem %s10, %s387
      %p389 = scmp.lt.s32.totalorder %s26, 1
      %s390 = scalar_select %p389, %s26, 1
      %s391 = smul.addr %s390, 4
      %s392 = smul.addr %s391, 8
      %s393 = scalar_lea.vmem %s0, %s392
      %p394 = scmp.lt.s32.totalorder %s27, 3
      %s395 = scalar_select %p394, %s27, 3
      %s396 = smul.addr %s395, 8
      %s397 = scalar_lea.vmem %s7, %s396
      %p398 = scmp.lt.s32.totalorder %s26, 1
      %s399 = scalar_select %p398, %s26, 1
      %s400 = smul.addr %s399, 2
      %s401 = smul.addr %s400, 8
      %s402 = scalar_lea.vmem %s9, %s401
      %p403 = scmp.lt.s32.totalorder %s26, 1
      %s404 = scalar_select %p403, %s26, 1
      %p405 = scmp.lt.s32.totalorder %s27, 3
      %s406 = scalar_select %p405, %s27, 3
      %s407 = smul.addr %s406, 2
      %s408 = smul.addr %s404, 8
      %s409 = sadd.s32 %s407, %s408
      %s410 = smul.addr %s409, 8
      %s411 = scalar_lea.vmem %s10, %s410
      %p412 = scmp.eq.s32.totalorder %s27, 0
      // Predicated region
      $region57: #{tpu_custom_call.1} parent=55 // pred_check
        %p413 = pneg %p412
      $region58: #{tpu_custom_call.1} parent=55 // pred_check_branch
        %415 = sbr.rel (%p413) target = $region60
      $region59: #{tpu_custom_call.1} parent=55 // pred_region
        %v416 = vld [vmem:[%s393] sm:$0xff]
        %v417 = vld [vmem:[%s393 + $0x8] sm:$0xff]
        %v418 = vld [vmem:[%s393 + $0x10] sm:$0xff]
        %v419 = vld [vmem:[%s393 + $0x18] sm:$0xff]
        %v420 = vld [vmem:[%s1] sm:$0xff]
        %v421 = vld [vmem:[%s1 + $0x8] sm:$0xff]
        %v422 = vld [vmem:[%s1 + $0x10] sm:$0xff]
        %v423 = vld [vmem:[%s1 + $0x18] sm:$0xff]
        %v424 = vld [vmem:[%s2] sm:$0xff]
        %v425 = vld [vmem:[%s2 + $0x8] sm:$0xff]
        %v426 = vld [vmem:[%s2 + $0x10] sm:$0xff]
        %v427 = vld [vmem:[%s2 + $0x18] sm:$0xff]
        %429 = vset.pattern.permute.xlu0 0
        %430 = vperm.xlu0 %429, %v424
        %v431 = vpop.permute.xlu0 %430
        %434 = vset.pattern.permute.xlu0 0
        %435 = vperm.xlu0 %434, %v425
        %v436 = vpop.permute.xlu0 %435
        %439 = vset.pattern.permute.xlu0 0
        %440 = vperm.xlu0 %439, %v426
        %v441 = vpop.permute.xlu0 %440
        %444 = vset.pattern.permute.xlu0 0
        %445 = vperm.xlu0 %444, %v427
        %v446 = vpop.permute.xlu0 %445
        %vm448 = vcmask 261120
        %v450 = vsel %vm448, %v420, 0
        %v453 = vsel %vm448, %v421, 0
        %v456 = vsel %vm448, %v422, 0
        %v459 = vsel %vm448, %v423, 0
        %461 = vmatprep.subr.mxu0 0.0
        %462 = vmatpush1.msra.mxu0 %v416
        %463 = vmatprep.subr.mxu0 0.0
        %464 = vmatpush1.msra.mxu0 %v417
        %465 = vmatprep.subr.mxu0 0.0
        %466 = vmatpush1.msra.mxu0 %v418
        %467 = vmatprep.subr.mxu0 0.0
        %468 = vmatpush1.msra.mxu0 %v419
        %469 = vmatprep.subr.mxu0 0.0
        %470 = vmatpush1.msra.mxu0 0.0
        %471 = vmatprep.subr.mxu0 0.0
        %472 = vmatpush1.msra.mxu0 0.0
        %473 = vmatprep.subr.mxu0 0.0
        %474 = vmatpush1.msra.mxu0 0.0
        %475 = vmatprep.subr.mxu0 0.0
        %476 = vmatpush1.msra.mxu0 0.0
        %477 = vmatprep.subr.mxu0 0.0
        %478 = vmatpush1.msra.mxu0 0.0
        %479 = vmatprep.subr.mxu0 0.0
        %480 = vmatpush1.msra.mxu0 0.0
        %481 = vmatprep.subr.mxu0 0.0
        %482 = vmatpush1.msra.mxu0 0.0
        %483 = vmatprep.subr.mxu0 0.0
        %484 = vmatpush1.msra.mxu0 0.0
        %485 = vmatprep.subr.mxu0 0.0
        %486 = vmatpush1.msra.mxu0 0.0
        %487 = vmatprep.subr.mxu0 0.0
        %488 = vmatpush1.msra.mxu0 0.0
        %489 = vmatprep.subr.mxu0 0.0
        %490 = vmatpush1.msra.mxu0 0.0
        %491 = vmatprep.subr.mxu0 0.0
        %492 = vmatpush1.msra.mxu0 0.0
        %493 = vmatprep.subr.mxu0 0.0
        %494 = vmatpush1.msra.mxu0 0.0
        %495 = vmatprep.subr.mxu0 0.0
        %496 = vmatpush1.msra.mxu0 0.0
        %497 = vmatprep.subr.mxu0 0.0
        %498 = vmatpush1.msra.mxu0 0.0
        %499 = vmatprep.subr.mxu0 0.0
        %500 = vmatpush1.msra.mxu0 0.0
        %501 = vmatprep.subr.mxu0 0.0
        %502 = vmatpush1.msra.mxu0 0.0
        %503 = vmatprep.subr.mxu0 0.0
        %504 = vmatpush1.msra.mxu0 0.0
        %505 = vmatprep.subr.mxu0 0.0
        %506 = vmatpush1.msra.mxu0 0.0
        %507 = vmatprep.subr.mxu0 0.0
        %508 = vmatpush1.msra.mxu0 0.0
        %509 = vmatprep.subr.mxu0 0.0
        %510 = vmatpush1.msra.mxu0 0.0
        %511 = vmatprep.subr.mxu0 0.0
        %512 = vmatpush1.msra.mxu0 0.0
        %513 = vmatprep.subr.mxu0 0.0
        %514 = vmatpush1.msra.mxu0 0.0
        %515 = vmatprep.subr.mxu0 0.0
        %516 = vmatpush1.msra.mxu0 0.0
        %517 = vmatprep.subr.mxu0 0.0
        %518 = vmatpush1.msra.mxu0 0.0
        %519 = vmatprep.subr.mxu0 0.0
        %520 = vmatpush1.msra.mxu0 0.0
        %521 = vmatprep.subr.mxu0 0.0
        %522 = vmatpush1.msra.mxu0 0.0
        %523 = vmatprep.subr.mxu0 0.0
        %524 = vmatpush1.msra.mxu0 0.0
        %525 = vmatprep.mubr.f32.mxu0 0.0
        %526 = vmatmul.mubr.f32.gmra.mrb[0].mxu0 %v450
        %v527 = vpop.f32.mrb[0].mxu0
        %v528 = vadd.f32 %v431, %v527
        %v529 = vpop.f32.mrb[0].mxu0
        %530 = vmatprep.mubr.f32.mxu0 0.0
        %531 = vmatmul.mubr.f32.gmra.mrb[0].mxu0 %v453
        %v532 = vpop.f32.mrb[0].mxu0
        %v533 = vadd.f32 %v436, %v532
        %v534 = vpop.f32.mrb[0].mxu0
        %535 = vmatprep.mubr.f32.mxu0 0.0
        %536 = vmatmul.mubr.f32.gmra.mrb[0].mxu0 %v456
        %v537 = vpop.f32.mrb[0].mxu0
        %v538 = vadd.f32 %v441, %v537
        %v539 = vpop.f32.mrb[0].mxu0
        %540 = vmatprep.mubr.f32.mxu0 0.0
        %541 = vmatmul.mubr.f32.gmra.mrb[0].mxu0 %v459
        %v542 = vpop.f32.mrb[0].mxu0
        %v543 = vadd.f32 %v446, %v542
        %v544 = vpop.f32.mrb[0].mxu0
        %545 = vdwg.mxu0
        %v546 = vld [vmem:[%s3] sm:$0xff]
        %v547 = vld [vmem:[%s3 + $0x8] sm:$0xff]
        %v548 = vld [vmem:[%s3 + $0x10] sm:$0xff]
        %v549 = vld [vmem:[%s3 + $0x18] sm:$0xff]
        %v550 = vld [vmem:[%s4] sm:$0xff]
        %v551 = vld [vmem:[%s4 + $0x8] sm:$0xff]
        %v552 = vld [vmem:[%s4 + $0x10] sm:$0xff]
        %v553 = vld [vmem:[%s4 + $0x18] sm:$0xff]
        %555 = vset.pattern.permute.xlu0 0
        %556 = vperm.xlu0 %555, %v550
        %v557 = vpop.permute.xlu0 %556
        %560 = vset.pattern.permute.xlu0 0
        %561 = vperm.xlu0 %560, %v551
        %v562 = vpop.permute.xlu0 %561
        %565 = vset.pattern.permute.xlu0 0
        %566 = vperm.xlu0 %565, %v552
        %v567 = vpop.permute.xlu0 %566
        %570 = vset.pattern.permute.xlu0 0
        %571 = vperm.xlu0 %570, %v553
        %v572 = vpop.permute.xlu0 %571
        %v575 = vsel %vm448, %v546, 0
        %v578 = vsel %vm448, %v547, 0
        %v581 = vsel %vm448, %v548, 0
        %v584 = vsel %vm448, %v549, 0
        %586 = vmatprep.subr.mxu0 0.0
        %587 = vmatpush1.msra.mxu0 %v416
        %588 = vmatprep.subr.mxu0 0.0
        %589 = vmatpush1.msra.mxu0 %v417
        %590 = vmatprep.subr.mxu0 0.0
        %591 = vmatpush1.msra.mxu0 %v418
        %592 = vmatprep.subr.mxu0 0.0
        %593 = vmatpush1.msra.mxu0 %v419
        %594 = vmatprep.subr.mxu0 0.0
        %595 = vmatpush1.msra.mxu0 0.0
        %596 = vmatprep.subr.mxu0 0.0
        %597 = vmatpush1.msra.mxu0 0.0
        %598 = vmatprep.subr.mxu0 0.0
        %599 = vmatpush1.msra.mxu0 0.0
        %600 = vmatprep.subr.mxu0 0.0
        %601 = vmatpush1.msra.mxu0 0.0
        %602 = vmatprep.subr.mxu0 0.0
        %603 = vmatpush1.msra.mxu0 0.0
        %604 = vmatprep.subr.mxu0 0.0
        %605 = vmatpush1.msra.mxu0 0.0
        %606 = vmatprep.subr.mxu0 0.0
        %607 = vmatpush1.msra.mxu0 0.0
        %608 = vmatprep.subr.mxu0 0.0
        %609 = vmatpush1.msra.mxu0 0.0
        %610 = vmatprep.subr.mxu0 0.0
        %611 = vmatpush1.msra.mxu0 0.0
        %612 = vmatprep.subr.mxu0 0.0
        %613 = vmatpush1.msra.mxu0 0.0
        %614 = vmatprep.subr.mxu0 0.0
        %615 = vmatpush1.msra.mxu0 0.0
        %616 = vmatprep.subr.mxu0 0.0
        %617 = vmatpush1.msra.mxu0 0.0
        %618 = vmatprep.subr.mxu0 0.0
        %619 = vmatpush1.msra.mxu0 0.0
        %620 = vmatprep.subr.mxu0 0.0
        %621 = vmatpush1.msra.mxu0 0.0
        %622 = vmatprep.subr.mxu0 0.0
        %623 = vmatpush1.msra.mxu0 0.0
        %624 = vmatprep.subr.mxu0 0.0
        %625 = vmatpush1.msra.mxu0 0.0
        %626 = vmatprep.subr.mxu0 0.0
        %627 = vmatpush1.msra.mxu0 0.0
        %628 = vmatprep.subr.mxu0 0.0
        %629 = vmatpush1.msra.mxu0 0.0
        %630 = vmatprep.subr.mxu0 0.0
        %631 = vmatpush1.msra.mxu0 0.0
        %632 = vmatprep.subr.mxu0 0.0
        %633 = vmatpush1.msra.mxu0 0.0
        %634 = vmatprep.subr.mxu0 0.0
        %635 = vmatpush1.msra.mxu0 0.0
        %636 = vmatprep.subr.mxu0 0.0
        %637 = vmatpush1.msra.mxu0 0.0
        %638 = vmatprep.subr.mxu0 0.0
        %639 = vmatpush1.msra.mxu0 0.0
        %640 = vmatprep.subr.mxu0 0.0
        %641 = vmatpush1.msra.mxu0 0.0
        %642 = vmatprep.subr.mxu0 0.0
        %643 = vmatpush1.msra.mxu0 0.0
        %644 = vmatprep.subr.mxu0 0.0
        %645 = vmatpush1.msra.mxu0 0.0
        %646 = vmatprep.subr.mxu0 0.0
        %647 = vmatpush1.msra.mxu0 0.0
        %648 = vmatprep.subr.mxu0 0.0
        %649 = vmatpush1.msra.mxu0 0.0
        %650 = vmatprep.mubr.f32.mxu0 0.0
        %651 = vmatmul.mubr.f32.gmra.mrb[0].mxu0 %v575
        %v652 = vpop.f32.mrb[0].mxu0
        %v653 = vadd.f32 %v557, %v652
        %v654 = vpop.f32.mrb[0].mxu0
        %655 = vmatprep.mubr.f32.mxu0 0.0
        %656 = vmatmul.mubr.f32.gmra.mrb[0].mxu0 %v578
        %v657 = vpop.f32.mrb[0].mxu0
        %v658 = vadd.f32 %v562, %v657
        %v659 = vpop.f32.mrb[0].mxu0
        %660 = vmatprep.mubr.f32.mxu0 0.0
        %661 = vmatmul.mubr.f32.gmra.mrb[0].mxu0 %v581
        %v662 = vpop.f32.mrb[0].mxu0
        %v663 = vadd.f32 %v567, %v662
        %v664 = vpop.f32.mrb[0].mxu0
        %665 = vmatprep.mubr.f32.mxu0 0.0
        %666 = vmatmul.mubr.f32.gmra.mrb[0].mxu0 %v584
        %v667 = vpop.f32.mrb[0].mxu0
        %v668 = vadd.f32 %v572, %v667
        %v669 = vpop.f32.mrb[0].mxu0
        %670 = vdwg.mxu0
        %v671 = vld [vmem:[%s5] sm:$0xff]
        %v672 = vld [vmem:[%s5 + $0x8] sm:$0xff]
        %v673 = vld [vmem:[%s5 + $0x10] sm:$0xff]
        %v674 = vld [vmem:[%s5 + $0x18] sm:$0xff]
        %v675 = vld [vmem:[%s6] sm:$0xff]
        %v676 = vld [vmem:[%s6 + $0x8] sm:$0xff]
        %v677 = vld [vmem:[%s6 + $0x10] sm:$0xff]
        %v678 = vld [vmem:[%s6 + $0x18] sm:$0xff]
        %680 = vset.pattern.permute.xlu0 0
        %681 = vperm.xlu0 %680, %v675
        %v682 = vpop.permute.xlu0 %681
        %685 = vset.pattern.permute.xlu0 0
        %686 = vperm.xlu0 %685, %v676
        %v687 = vpop.permute.xlu0 %686
        %690 = vset.pattern.permute.xlu0 0
        %691 = vperm.xlu0 %690, %v677
        %v692 = vpop.permute.xlu0 %691
        %695 = vset.pattern.permute.xlu0 0
        %696 = vperm.xlu0 %695, %v678
        %v697 = vpop.permute.xlu0 %696
        %v700 = vsel %vm448, %v671, 0
        %v703 = vsel %vm448, %v672, 0
        %v706 = vsel %vm448, %v673, 0
        %v709 = vsel %vm448, %v674, 0
        %711 = vmatprep.subr.mxu0 0.0
        %712 = vmatpush1.msra.mxu0 %v416
        %713 = vmatprep.subr.mxu0 0.0
        %714 = vmatpush1.msra.mxu0 %v417
        %715 = vmatprep.subr.mxu0 0.0
        %716 = vmatpush1.msra.mxu0 %v418
        %717 = vmatprep.subr.mxu0 0.0
        %718 = vmatpush1.msra.mxu0 %v419
        %719 = vmatprep.subr.mxu0 0.0
        %720 = vmatpush1.msra.mxu0 0.0
        %721 = vmatprep.subr.mxu0 0.0
        %722 = vmatpush1.msra.mxu0 0.0
        %723 = vmatprep.subr.mxu0 0.0
        %724 = vmatpush1.msra.mxu0 0.0
        %725 = vmatprep.subr.mxu0 0.0
        %726 = vmatpush1.msra.mxu0 0.0
        %727 = vmatprep.subr.mxu0 0.0
        %728 = vmatpush1.msra.mxu0 0.0
        %729 = vmatprep.subr.mxu0 0.0
        %730 = vmatpush1.msra.mxu0 0.0
        %731 = vmatprep.subr.mxu0 0.0
        %732 = vmatpush1.msra.mxu0 0.0
        %733 = vmatprep.subr.mxu0 0.0
        %734 = vmatpush1.msra.mxu0 0.0
        %735 = vmatprep.subr.mxu0 0.0
        %736 = vmatpush1.msra.mxu0 0.0
        %737 = vmatprep.subr.mxu0 0.0
        %738 = vmatpush1.msra.mxu0 0.0
        %739 = vmatprep.subr.mxu0 0.0
        %740 = vmatpush1.msra.mxu0 0.0
        %741 = vmatprep.subr.mxu0 0.0
        %742 = vmatpush1.msra.mxu0 0.0
        %743 = vmatprep.subr.mxu0 0.0
        %744 = vmatpush1.msra.mxu0 0.0
        %745 = vmatprep.subr.mxu0 0.0
        %746 = vmatpush1.msra.mxu0 0.0
        %747 = vmatprep.subr.mxu0 0.0
        %748 = vmatpush1.msra.mxu0 0.0
        %749 = vmatprep.subr.mxu0 0.0
        %750 = vmatpush1.msra.mxu0 0.0
        %751 = vmatprep.subr.mxu0 0.0
        %752 = vmatpush1.msra.mxu0 0.0
        %753 = vmatprep.subr.mxu0 0.0
        %754 = vmatpush1.msra.mxu0 0.0
        %755 = vmatprep.subr.mxu0 0.0
        %756 = vmatpush1.msra.mxu0 0.0
        %757 = vmatprep.subr.mxu0 0.0
        %758 = vmatpush1.msra.mxu0 0.0
        %759 = vmatprep.subr.mxu0 0.0
        %760 = vmatpush1.msra.mxu0 0.0
        %761 = vmatprep.subr.mxu0 0.0
        %762 = vmatpush1.msra.mxu0 0.0
        %763 = vmatprep.subr.mxu0 0.0
        %764 = vmatpush1.msra.mxu0 0.0
        %765 = vmatprep.subr.mxu0 0.0
        %766 = vmatpush1.msra.mxu0 0.0
        %767 = vmatprep.subr.mxu0 0.0
        %768 = vmatpush1.msra.mxu0 0.0
        %769 = vmatprep.subr.mxu0 0.0
        %770 = vmatpush1.msra.mxu0 0.0
        %771 = vmatprep.subr.mxu0 0.0
        %772 = vmatpush1.msra.mxu0 0.0
        %773 = vmatprep.subr.mxu0 0.0
        %774 = vmatpush1.msra.mxu0 0.0
        %775 = vmatprep.mubr.f32.mxu0 0.0
        %776 = vmatmul.mubr.f32.gmra.mrb[0].mxu0 %v700
        %v777 = vpop.f32.mrb[0].mxu0
        %v778 = vadd.f32 %v682, %v777
        %v779 = vpop.f32.mrb[0].mxu0
        %780 = vmatprep.mubr.f32.mxu0 0.0
        %781 = vmatmul.mubr.f32.gmra.mrb[0].mxu0 %v703
        %v782 = vpop.f32.mrb[0].mxu0
        %v783 = vadd.f32 %v687, %v782
        %v784 = vpop.f32.mrb[0].mxu0
        %785 = vmatprep.mubr.f32.mxu0 0.0
        %786 = vmatmul.mubr.f32.gmra.mrb[0].mxu0 %v706
        %v787 = vpop.f32.mrb[0].mxu0
        %v788 = vadd.f32 %v692, %v787
        %v789 = vpop.f32.mrb[0].mxu0
        %790 = vmatprep.mubr.f32.mxu0 0.0
        %791 = vmatmul.mubr.f32.gmra.mrb[0].mxu0 %v709
        %v792 = vpop.f32.mrb[0].mxu0
        %v793 = vadd.f32 %v697, %v792
        %v794 = vpop.f32.mrb[0].mxu0
        %795 = vdwg.mxu0
        %vm796 = vcmask 80896
        %797 = vst.msk [vmem:[#allocation2] sm:$0xff] %vm796, %v528
        %798 = vst.msk [vmem:[#allocation2 + $0x8] sm:$0xff] %vm796, %v533
        %799 = vst.msk [vmem:[#allocation2 + $0x10] sm:$0xff] %vm796, %v538
        %800 = vst.msk [vmem:[#allocation2 + $0x18] sm:$0xff] %vm796, %v543
        %801 = vst.msk [vmem:[#allocation3] sm:$0xff] %vm796, %v653
        %802 = vst.msk [vmem:[#allocation3 + $0x8] sm:$0xff] %vm796, %v658
        %803 = vst.msk [vmem:[#allocation3 + $0x10] sm:$0xff] %vm796, %v663
        %804 = vst.msk [vmem:[#allocation3 + $0x18] sm:$0xff] %vm796, %v668
        %805 = vst.msk [vmem:[#allocation4] sm:$0xff] %vm796, %v778
        %806 = vst.msk [vmem:[#allocation4 + $0x8] sm:$0xff] %vm796, %v783
        %807 = vst.msk [vmem:[#allocation4 + $0x10] sm:$0xff] %vm796, %v788
        %808 = vst.msk [vmem:[#allocation4 + $0x18] sm:$0xff] %vm796, %v793
      $region60: #{tpu_custom_call.1} parent=55 // pred_fallthru
        _
      %s809 = smul.u32 %s27, 8
      %s810 = scalar_lea.vmem [#allocation2], %s809
      %v811 = vld [vmem:[%s810] sm:$0xff]
      %s812 = scalar_lea.vmem [#allocation3], %s809
      %v813 = vld [vmem:[%s812] sm:$0xff]
      %s814 = scalar_lea.vmem [#allocation4], %s809
      %v815 = vld [vmem:[%s814] sm:$0xff]
      %816 = vxpose.xlu0.b32.start [1/16] %v811, 128
      %817 = vxpose.xlu0.b32.cont [2/16] 0.0, 128
      %818 = vxpose.xlu0.b32.cont [3/16] 0.0, 128
      %819 = vxpose.xlu0.b32.cont [4/16] 0.0, 128
      %820 = vxpose.xlu0.b32.cont [5/16] 0.0, 128
      %821 = vxpose.xlu0.b32.cont [6/16] 0.0, 128
      %822 = vxpose.xlu0.b32.cont [7/16] 0.0, 128
      %823 = vxpose.xlu0.b32.cont [8/16] 0.0, 128
      %824 = vxpose.xlu0.b32.cont [9/16] 0.0, 128
      %825 = vxpose.xlu0.b32.cont [10/16] 0.0, 128
      %826 = vxpose.xlu0.b32.cont [11/16] 0.0, 128
      %827 = vxpose.xlu0.b32.cont [12/16] 0.0, 128
      %828 = vxpose.xlu0.b32.cont [13/16] 0.0, 128
      %829 = vxpose.xlu0.b32.cont [14/16] 0.0, 128
      %830 = vxpose.xlu0.b32.cont [15/16] 0.0, 128
      %831 = vxpose.xlu0.b32.end [16/16] 0.0, 128
      %v832 = vpop.trf.xlu0
      %v833 = vpop.trf.xlu0
      %v834 = vpop.trf.xlu0
      %v835 = vpop.trf.xlu0
      %v836 = vpop.trf.xlu0
      %v837 = vpop.trf.xlu0
      %v838 = vpop.trf.xlu0
      %v839 = vpop.trf.xlu0
      %v840 = vpop.trf.xlu0
      %v841 = vpop.trf.xlu0
      %v842 = vpop.trf.xlu0
      %v843 = vpop.trf.xlu0
      %v844 = vpop.trf.xlu0
      %v845 = vpop.trf.xlu0
      %v846 = vpop.trf.xlu0
      %v847 = vpop.trf.xlu0
      %vm848 = vcmask 64512
      %v850 = vsel %vm848, %v832, 0
      %v853 = vsel %vm848, %v833, 0
      %855 = vmatprep.subr.mxu0 0.0
      %856 = vmatpush1.msra.mxu0 %v813
      %857 = vmatprep.subr.mxu0 0.0
      %858 = vmatpush1.msra.mxu0 0.0
      %859 = vmatprep.subr.mxu0 0.0
      %860 = vmatpush1.msra.mxu0 0.0
      %861 = vmatprep.subr.mxu0 0.0
      %862 = vmatpush1.msra.mxu0 0.0
      %863 = vmatprep.subr.mxu0 0.0
      %864 = vmatpush1.msra.mxu0 0.0
      %865 = vmatprep.subr.mxu0 0.0
      %866 = vmatpush1.msra.mxu0 0.0
      %867 = vmatprep.subr.mxu0 0.0
      %868 = vmatpush1.msra.mxu0 0.0
      %869 = vmatprep.subr.mxu0 0.0
      %870 = vmatpush1.msra.mxu0 0.0
      %871 = vmatprep.subr.mxu0 0.0
      %872 = vmatpush1.msra.mxu0 0.0
      %873 = vmatprep.subr.mxu0 0.0
      %874 = vmatpush1.msra.mxu0 0.0
      %875 = vmatprep.subr.mxu0 0.0
      %876 = vmatpush1.msra.mxu0 0.0
      %877 = vmatprep.subr.mxu0 0.0
      %878 = vmatpush1.msra.mxu0 0.0
      %879 = vmatprep.subr.mxu0 0.0
      %880 = vmatpush1.msra.mxu0 0.0
      %881 = vmatprep.subr.mxu0 0.0
      %882 = vmatpush1.msra.mxu0 0.0
      %883 = vmatprep.subr.mxu0 0.0
      %884 = vmatpush1.msra.mxu0 0.0
      %885 = vmatprep.subr.mxu0 0.0
      %886 = vmatpush1.msra.mxu0 0.0
      %887 = vmatprep.subr.mxu0 0.0
      %888 = vmatpush1.msra.mxu0 0.0
      %889 = vmatprep.subr.mxu0 0.0
      %890 = vmatpush1.msra.mxu0 0.0
      %891 = vmatprep.subr.mxu0 0.0
      %892 = vmatpush1.msra.mxu0 0.0
      %893 = vmatprep.subr.mxu0 0.0
      %894 = vmatpush1.msra.mxu0 0.0
      %895 = vmatprep.subr.mxu0 0.0
      %896 = vmatpush1.msra.mxu0 0.0
      %897 = vmatprep.subr.mxu0 0.0
      %898 = vmatpush1.msra.mxu0 0.0
      %899 = vmatprep.subr.mxu0 0.0
      %900 = vmatpush1.msra.mxu0 0.0
      %901 = vmatprep.subr.mxu0 0.0
      %902 = vmatpush1.msra.mxu0 0.0
      %903 = vmatprep.subr.mxu0 0.0
      %904 = vmatpush1.msra.mxu0 0.0
      %905 = vmatprep.subr.mxu0 0.0
      %906 = vmatpush1.msra.mxu0 0.0
      %907 = vmatprep.subr.mxu0 0.0
      %908 = vmatpush1.msra.mxu0 0.0
      %909 = vmatprep.subr.mxu0 0.0
      %910 = vmatpush1.msra.mxu0 0.0
      %911 = vmatprep.subr.mxu0 0.0
      %912 = vmatpush1.msra.mxu0 0.0
      %913 = vmatprep.subr.mxu0 0.0
      %914 = vmatpush1.msra.mxu0 0.0
      %915 = vmatprep.subr.mxu0 0.0
      %916 = vmatpush1.msra.mxu0 0.0
      %917 = vmatprep.subr.mxu0 0.0
      %918 = vmatpush1.msra.mxu0 0.0
      %919 = vmatprep.mubr.f32.mxu0 0.0
      %920 = vmatmul.mubr.f32.gmra.mrb[0].mxu0 %v850
      %v921 = vpop.f32.mrb[0].mxu0
      %v922 = vadd.f32 0.0, %v921
      %v923 = vpop.f32.mrb[0].mxu0
      %924 = vmatprep.mubr.f32.mxu0 0.0
      %925 = vmatmul.mubr.f32.gmra.mrb[0].mxu0 %v853
      %v926 = vpop.f32.mrb[0].mxu0
      %v927 = vadd.f32 0.0, %v926
      %v928 = vpop.f32.mrb[0].mxu0
      %929 = vdwg.mxu0
      %vm930 = vcmask 80896
      %v931 = vsel %vm930, %v922, -inf
      %932 = vmax.xlane.f32.xlu0 %v931
      %v933 = vpop.xlane.xlu0 %932
      %vm934 = vcmask 74752
      %v935 = vsel %vm934, %v927, -inf
      %936 = vmax.xlane.f32.xlu0 %v935
      %v937 = vpop.xlane.xlu0 %936
      %v938 = vsub.f32 %v922, %v933
      %v939 = vsub.f32 %v927, %v937
      %v940 = vmul.f32 %v938, 1.442695
      %v941 = vpow.pop %v940
      %v942 = vmul.f32 %v939, 1.442695
      %v943 = vpow.pop %v942
      %v944 = vsel %vm930, %v941, 0.0
      %945 = vadd.xlane.f32.xlu0 %v944
      %v946 = vpop.xlane.xlu0 %945
      %v947 = vsel %vm934, %v943, 0.0
      %948 = vadd.xlane.f32.xlu0 %v947
      %v949 = vpop.xlane.xlu0 %948
      %v950 = vrcp.pop %v946
      %v951 = vmul.f32 %v941, %v950
      %v952 = vrcp.pop %v949
      %v953 = vmul.f32 %v943, %v952
      %954 = vst.msk [vmem:[%s411] sm:$0xff] %vm930, %v951
      %955 = vst.msk [vmem:[%s411 + $0x8] sm:$0x3] %vm934, %v953
      %v957 = vsel %vm930, %v951, 0
      %v960 = vsel %vm930, %v953, 0
      %v963 = vsel %vm930, %v815, 0
      %965 = vmatprep.subr.mxu0 0.0
      %966 = vmatpush1.xpose.msra.mxu0 %v963
      %967 = vmatprep.subr.mxu0 0.0
      %968 = vmatpush1.xpose.msra.mxu0 0.0
      %969 = vmatprep.subr.mxu0 0.0
      %970 = vmatpush1.xpose.msra.mxu0 0.0
      %971 = vmatprep.subr.mxu0 0.0
      %972 = vmatpush1.xpose.msra.mxu0 0.0
      %973 = vmatprep.subr.mxu0 0.0
      %974 = vmatpush1.xpose.msra.mxu0 0.0
      %975 = vmatprep.subr.mxu0 0.0
      %976 = vmatpush1.xpose.msra.mxu0 0.0
      %977 = vmatprep.subr.mxu0 0.0
      %978 = vmatpush1.xpose.msra.mxu0 0.0
      %979 = vmatprep.subr.mxu0 0.0
      %980 = vmatpush1.xpose.msra.mxu0 0.0
      %981 = vmatprep.subr.mxu0 0.0
      %982 = vmatpush1.xpose.msra.mxu0 0.0
      %983 = vmatprep.subr.mxu0 0.0
      %984 = vmatpush1.xpose.msra.mxu0 0.0
      %985 = vmatprep.subr.mxu0 0.0
      %986 = vmatpush1.xpose.msra.mxu0 0.0
      %987 = vmatprep.subr.mxu0 0.0
      %988 = vmatpush1.xpose.msra.mxu0 0.0
      %989 = vmatprep.subr.mxu0 0.0
      %990 = vmatpush1.xpose.msra.mxu0 0.0
      %991 = vmatprep.subr.mxu0 0.0
      %992 = vmatpush1.xpose.msra.mxu0 0.0
      %993 = vmatprep.subr.mxu0 0.0
      %994 = vmatpush1.xpose.msra.mxu0 0.0
      %995 = vmatprep.subr.mxu0 0.0
      %996 = vmatpush1.xpose.msra.mxu0 0.0
      %997 = vmatprep.subr.mxu0 0.0
      %998 = vmatpush1.xpose.msra.mxu0 0.0
      %999 = vmatprep.subr.mxu0 0.0
      %1000 = vmatpush1.xpose.msra.mxu0 0.0
      %1001 = vmatprep.subr.mxu0 0.0
      %1002 = vmatpush1.xpose.msra.mxu0 0.0
      %1003 = vmatprep.subr.mxu0 0.0
      %1004 = vmatpush1.xpose.msra.mxu0 0.0
      %1005 = vmatprep.subr.mxu0 0.0
      %1006 = vmatpush1.xpose.msra.mxu0 0.0
      %1007 = vmatprep.subr.mxu0 0.0
      %1008 = vmatpush1.xpose.msra.mxu0 0.0
      %1009 = vmatprep.subr.mxu0 0.0
      %1010 = vmatpush1.xpose.msra.mxu0 0.0
      %1011 = vmatprep.subr.mxu0 0.0
      %1012 = vmatpush1.xpose.msra.mxu0 0.0
      %1013 = vmatprep.subr.mxu0 0.0
      %1014 = vmatpush1.xpose.msra.mxu0 0.0
      %1015 = vmatprep.subr.mxu0 0.0
      %1016 = vmatpush1.xpose.msra.mxu0 0.0
      %1017 = vmatprep.subr.mxu0 0.0
      %1018 = vmatpush1.xpose.msra.mxu0 0.0
      %1019 = vmatprep.subr.mxu0 0.0
      %1020 = vmatpush1.xpose.msra.mxu0 0.0
      %1021 = vmatprep.subr.mxu0 0.0
      %1022 = vmatpush1.xpose.msra.mxu0 0.0
      %1023 = vmatprep.subr.mxu0 0.0
      %1024 = vmatpush1.xpose.msra.mxu0 0.0
      %1025 = vmatprep.subr.mxu0 0.0
      %1026 = vmatpush1.xpose.msra.mxu0 0.0
      %1027 = vmatprep.subr.mxu0 0.0
      %1028 = vmatpush1.xpose.msra.mxu0 0.0
      %1029 = vmatprep.mubr.f32.mxu0 0.0
      %1030 = vmatmul.mubr.f32.gmra.mrb[0].mxu0 %v957
      %v1031 = vpop.f32.mrb[0].mxu0
      %v1032 = vadd.f32 0.0, %v1031
      %v1033 = vpop.f32.mrb[0].mxu0
      %1034 = vmatprep.mubr.f32.mxu0 0.0
      %1035 = vmatmul.mubr.f32.gmra.mrb[0].mxu0 %v960
      %v1036 = vpop.f32.mrb[0].mxu0
      %v1037 = vadd.f32 0.0, %v1036
      %v1038 = vpop.f32.mrb[0].mxu0
      %1039 = vdwg.mxu0
      %v1040 = vld [vmem:[%s397] sm:$0xff]
      %v1042 = vsel %vm848, %v1032, 0
      %v1045 = vsel %vm848, %v1037, 0
      %1047 = vmatprep.subr.mxu0 0.0
      %1048 = vmatpush1.msra.mxu0 %v1040
      %1049 = vmatprep.subr.mxu0 0.0
      %1050 = vmatpush1.msra.mxu0 0.0
      %1051 = vmatprep.subr.mxu0 0.0
      %1052 = vmatpush1.msra.mxu0 0.0
      %1053 = vmatprep.subr.mxu0 0.0
      %1054 = vmatpush1.msra.mxu0 0.0
      %1055 = vmatprep.subr.mxu0 0.0
      %1056 = vmatpush1.msra.mxu0 0.0
      %1057 = vmatprep.subr.mxu0 0.0
      %1058 = vmatpush1.msra.mxu0 0.0
      %1059 = vmatprep.subr.mxu0 0.0
      %1060 = vmatpush1.msra.mxu0 0.0
      %1061 = vmatprep.subr.mxu0 0.0
      %1062 = vmatpush1.msra.mxu0 0.0
      %1063 = vmatprep.subr.mxu0 0.0
      %1064 = vmatpush1.msra.mxu0 0.0
      %1065 = vmatprep.subr.mxu0 0.0
      %1066 = vmatpush1.msra.mxu0 0.0
      %1067 = vmatprep.subr.mxu0 0.0
      %1068 = vmatpush1.msra.mxu0 0.0
      %1069 = vmatprep.subr.mxu0 0.0
      %1070 = vmatpush1.msra.mxu0 0.0
      %1071 = vmatprep.subr.mxu0 0.0
      %1072 = vmatpush1.msra.mxu0 0.0
      %1073 = vmatprep.subr.mxu0 0.0
      %1074 = vmatpush1.msra.mxu0 0.0
      %1075 = vmatprep.subr.mxu0 0.0
      %1076 = vmatpush1.msra.mxu0 0.0
      %1077 = vmatprep.subr.mxu0 0.0
      %1078 = vmatpush1.msra.mxu0 0.0
      %1079 = vmatprep.subr.mxu0 0.0
      %1080 = vmatpush1.msra.mxu0 0.0
      %1081 = vmatprep.subr.mxu0 0.0
      %1082 = vmatpush1.msra.mxu0 0.0
      %1083 = vmatprep.subr.mxu0 0.0
      %1084 = vmatpush1.msra.mxu0 0.0
      %1085 = vmatprep.subr.mxu0 0.0
      %1086 = vmatpush1.msra.mxu0 0.0
      %1087 = vmatprep.subr.mxu0 0.0
      %1088 = vmatpush1.msra.mxu0 0.0
      %1089 = vmatprep.subr.mxu0 0.0
      %1090 = vmatpush1.msra.mxu0 0.0
      %1091 = vmatprep.subr.mxu0 0.0
      %1092 = vmatpush1.msra.mxu0 0.0
      %1093 = vmatprep.subr.mxu0 0.0
      %1094 = vmatpush1.msra.mxu0 0.0
      %1095 = vmatprep.subr.mxu0 0.0
      %1096 = vmatpush1.msra.mxu0 0.0
      %1097 = vmatprep.subr.mxu0 0.0
      %1098 = vmatpush1.msra.mxu0 0.0
      %1099 = vmatprep.subr.mxu0 0.0
      %1100 = vmatpush1.msra.mxu0 0.0
      %1101 = vmatprep.subr.mxu0 0.0
      %1102 = vmatpush1.msra.mxu0 0.0
      %1103 = vmatprep.subr.mxu0 0.0
      %1104 = vmatpush1.msra.mxu0 0.0
      %1105 = vmatprep.subr.mxu0 0.0
      %1106 = vmatpush1.msra.mxu0 0.0
      %1107 = vmatprep.subr.mxu0 0.0
      %1108 = vmatpush1.msra.mxu0 0.0
      %1109 = vmatprep.subr.mxu0 0.0
      %1110 = vmatpush1.msra.mxu0 0.0
      %1111 = vmatprep.mubr.f32.mxu0 0.0
      %1112 = vmatmul.mubr.f32.gmra.mrb[0].mxu0 %v1042
      %v1113 = vpop.f32.mrb[0].mxu0
      %v1114 = vadd.f32 0.0, %v1113
      %v1115 = vpop.f32.mrb[0].mxu0
      %1116 = vmatprep.mubr.f32.mxu0 0.0
      %1117 = vmatmul.mubr.f32.gmra.mrb[0].mxu0 %v1045
      %v1118 = vpop.f32.mrb[0].mxu0
      %v1119 = vadd.f32 0.0, %v1118
      %v1120 = vpop.f32.mrb[0].mxu0
      %1121 = vdwg.mxu0
      // Predicated region
      $region61: #{tpu_custom_call.1} parent=55 // pred_check
        %p1122 = pneg %p412
      $region62: #{tpu_custom_call.1} parent=55 // pred_check_branch
        %1124 = sbr.rel (%p1122) target = $region64
      $region63: #{tpu_custom_call.1} parent=55 // pred_region
        %v1125 = vld [vmem:[%s8] sm:$0x1]
        %v1127 = vlaneseq
        %v1128 = vshrl.u32 %v1127, 7
        %v1129 = vsub.s32 0, %v1128
        %v1130 = vrot.slane %v1125, %v1129
        %v1132 = vadd.f32 %v1114, %v1130
        %v1133 = vadd.f32 %v1119, %v1130
        %vm1134 = vcmask 261120
        %1135 = vst.msk [vmem:[%s402] sm:$0xff] %vm1134, %v1132
        %vm1136 = vcmask 254976
        %1137 = vst.msk [vmem:[%s402 + $0x8] sm:$0x3] %vm1136, %v1133
      $region64: #{tpu_custom_call.1} parent=55 // pred_fallthru
        _
      %p1138 = scmp.gt.s32.totalorder %s27, 0
      // Predicated region
      $region65: #{tpu_custom_call.1} parent=55 // pred_check
        %p1139 = pneg %p1138
      $region66: #{tpu_custom_call.1} parent=55 // pred_check_branch
        %1141 = sbr.rel (%p1139) target = $region68
      $region67: #{tpu_custom_call.1} parent=55 // pred_region
        %v1142 = vld [vmem:[%s402] sm:$0xff]
        %v1143 = vld [vmem:[%s402 + $0x8] sm:$0x3]
        %v1144 = vadd.f32 %v1142, %v1114
        %v1145 = vadd.f32 %v1143, %v1119
        %vm1146 = vcmask 261120
        %1147 = vst.msk [vmem:[%s402] sm:$0xff] %vm1146, %v1144
        %vm1148 = vcmask 254976
        %1149 = vst.msk [vmem:[%s402 + $0x8] sm:$0x3] %vm1148, %v1145
      $region68: #{tpu_custom_call.1} parent=55 // pred_fallthru
        _
      %p1150 = scmp.lt.s32.totalorder %s26, 1
      %s1151 = scalar_select %p1150, %s26, 1
      %s1152 = smul.addr %s1151, 2
      %s1153 = smul.addr %s1152, 8
      %s1154 = scalar_lea.vmem %s9, %s1153
      %p1155 = scmp.lt.s32.totalorder %s26, 1
      %s1156 = scalar_select %p1155, %s26, 1
      %p1157 = scmp.lt.s32.totalorder %s27, 3
      %s1158 = scalar_select %p1157, %s27, 3
      %s1159 = smul.addr %s1158, 2
      %s1160 = smul.addr %s1156, 8
      %s1161 = sadd.s32 %s1159, %s1160
      %s1162 = smul.addr %s1161, 8
      %s1163 = scalar_lea.vmem %s10, %s1162
      // Predicated region
      $region69: #{tpu_custom_call.1} parent=55 // pred_check
        %p1164 = pneg %p251
      $region70: #{tpu_custom_call.1} parent=55 // pred_check_branch
        %1166 = sbr.rel (%p1164) target = $region72
      $region71: #{tpu_custom_call.1} parent=55 // pred_region
        _
      $region72: #{tpu_custom_call.1} parent=55 // pred_fallthru
        _
      // Predicated region
      $region73: #{tpu_custom_call.1} parent=55 // pred_check
        %p1167 = pneg %p279
      $region74: #{tpu_custom_call.1} parent=55 // pred_check_branch
        %1169 = sbr.rel (%p1167) target = $region76
      $region75: #{tpu_custom_call.1} parent=55 // pred_region
        _
      $region76: #{tpu_custom_call.1} parent=55 // pred_fallthru
        _
    $region56: #{tpu_custom_call.1} parent=5 // pred_fallthru
      _
    %p1170 = scmp.le.s32.totalorder 2, %s17
    // Predicated region
    $region77: #{tpu_custom_call.1} parent=5 // pred_check
      %p1171 = pneg %p1170
    $region78: #{tpu_custom_call.1} parent=5 // pred_check_branch
      %1173 = sbr.rel (%p1171) target = $region80
    $region79: #{tpu_custom_call.1} parent=5 // pred_region
      %s1174 = ssub.s32 %s17, 2
      // Predicated region
      $region81: #{tpu_custom_call.1} parent=79 // pred_check
        %p1175 = pneg %p257
      $region82: #{tpu_custom_call.1} parent=79 // pred_check_branch
        %1177 = sbr.rel (%p1175) target = $region84
      $region83: #{tpu_custom_call.1} parent=79 // pred_region
        %p1178 = scmp.lt.s32.totalorder %s28, 1
        %s1179 = scalar_select %p1178, %s28, 1
        %s1180 = smul.addr %s1179, 2
        %s1181 = smul.addr %s1180, 8
        %s1182 = scalar_lea.vmem %s9, %s1181
      $region84: #{tpu_custom_call.1} parent=79 // pred_fallthru
        _
      // Predicated region
      $region85: #{tpu_custom_call.1} parent=79 // pred_check
        %p1183 = pneg %p285
      $region86: #{tpu_custom_call.1} parent=79 // pred_check_branch
        %1185 = sbr.rel (%p1183) target = $region88
      $region87: #{tpu_custom_call.1} parent=79 // pred_region
        %p1186 = scmp.lt.s32.totalorder %s28, 1
        %s1187 = scalar_select %p1186, %s28, 1
        %p1188 = scmp.lt.s32.totalorder %s29, 3
        %s1189 = scalar_select %p1188, %s29, 3
        %s1190 = smul.addr %s1189, 2
        %s1191 = smul.addr %s1187, 8
        %s1192 = sadd.s32 %s1190, %s1191
        %s1193 = smul.addr %s1192, 8
        %s1194 = scalar_lea.vmem %s10, %s1193
      $region88: #{tpu_custom_call.1} parent=79 // pred_fallthru
        _
    $region80: #{tpu_custom_call.1} parent=5 // pred_fallthru
      _
  $region6: #{tpu_custom_call.1} parent=0 // loop_footer
    %s21 = sadd.s32 1, %s17
  $region7: #{tpu_custom_call.1} parent=0 // loop_footer_branch
    %16 = sbr.rel target = $region3
  $region8: #{tpu_custom_call.1} parent=0 // loop_exit
    _

</llo_original>
